<compile_context>
chip_gen: v7x
topology: tpu7x:2x2x1
jax: 0.10.0
libtpu: 0.0.40
codegen_flags: <defaults>
</compile_context>

<pallas_src>
import jax
import jax.numpy as jnp
from jax.experimental import pallas as pl
from jax.experimental.pallas import tpu as pltpu  # noqa: F401  (TPU backend)

LANE = 128          # TPU lane width
SUBLANE = 8         # f32 sublane count
IN_FEATURES = 10    # Linear(10, 32)
HIDDEN = 32
OUT_FEATURES = 1    # Linear(32, 1)
PARAM_ROWS = 16     # packed param block rows (multiple of SUBLANE)

# Row layout of the packed parameter block (PARAM_ROWS, LANE):
_W1_ROWS = slice(0, IN_FEATURES)        # rows 0..9  : W1^T (10 x 32, lane-padded)
_B1_ROW = IN_FEATURES                   # row 10     : b1   (32, lane-padded)
_W2_ROW = IN_FEATURES + 1               # row 11     : W2   (32, lane-padded)
_B2_ROW = IN_FEATURES + 2               # row 12     : b2 scalar at lane 0


def _mlp_kernel(x_ref, p_ref, o_ref):
    # x: (B, 10), p: (16, 128) packed params, o: (B, 1)
    x = x_ref[...]
    w1t = p_ref[_W1_ROWS, :]                                   # (10, 128)
    h = jnp.dot(x, w1t,
                preferred_element_type=jnp.float32,
                precision=jax.lax.Precision.HIGHEST)            # (B, 128) MXU
    h = jnp.maximum(h + p_ref[_B1_ROW:_B1_ROW + 1, :], 0.0)     # bias + ReLU, VPU
    # Second layer: out_features == 1, so a lane reduce beats a 128x128 matmul.
    y = jnp.sum(h * p_ref[_W2_ROW:_W2_ROW + 1, :],
                axis=-1, keepdims=True)                         # (B, 1) VPU+XLU
    o_ref[...] = (y + p_ref[_B2_ROW:_B2_ROW + 1, 0:1]).astype(o_ref.dtype)


def prepare_params(w1, b1, w2, b2):
    """One-time prep: pack all MLP params into a single (16, 128) f32 block.

    w1: (32, 10), b1: (32,), w2: (1, 32), b2: (1,)  (PyTorch Linear layout).
    Lane columns >= 32 are zero, so they contribute nothing to either layer.
    """
    params = jnp.zeros((PARAM_ROWS, LANE), jnp.float32)
    params = params.at[_W1_ROWS, :HIDDEN].set(w1.T)
    params = params.at[_B1_ROW, :HIDDEN].set(b1)
    params = params.at[_W2_ROW, :HIDDEN].set(w2[0])
    params = params.at[_B2_ROW, 0].set(b2[0])
    return params


@jax.jit
def mlp_forward(x, params):
    """x: (B, 10) f32 with B % 8 == 0 -> (B, 1) f32.

    params must come from prepare_params(). Callers pad the batch to a
    multiple of 8 at the boundary and slice rows afterwards.
    """
    B = x.shape[0]
    assert B % SUBLANE == 0, "pad batch to a multiple of 8 at the boundary"
    full = lambda a: pl.BlockSpec(a.shape, lambda: (0,) * a.ndim)
    return pl.pallas_call(
        _mlp_kernel,
        out_shape=jax.ShapeDtypeStruct((B, OUT_FEATURES), jnp.float32),
        in_specs=[full(x), full(params)],
        out_specs=pl.BlockSpec((B, OUT_FEATURES), lambda: (0, 0)),
    )(x, params)


def _init_params(key):
    """Deterministic parameter init mirroring torch.nn.Linear shapes."""
    k1, k2, k3, k4 = jax.random.split(key, 4)
    bound1 = 1.0 / jnp.sqrt(float(IN_FEATURES))
    w1 = jax.random.uniform(k1, (HIDDEN, IN_FEATURES), jnp.float32, -bound1, bound1)
    b1 = jax.random.uniform(k2, (HIDDEN,), jnp.float32, -bound1, bound1)
    bound2 = 1.0 / jnp.sqrt(float(HIDDEN))
    w2 = jax.random.uniform(k3, (OUT_FEATURES, HIDDEN), jnp.float32, -bound2, bound2)
    b2 = jax.random.uniform(k4, (OUT_FEATURES,), jnp.float32, -bound2, bound2)
    return w1, b1, w2, b2


if __name__ == "__main__":
    key = jax.random.PRNGKey(0)
    kx, kp = jax.random.split(key)
    x = jax.random.normal(kx, (3, IN_FEATURES), jnp.float32)  # matches torch.randn(3, 10)
    w1, b1, w2, b2 = _init_params(kp)

    # One-time weight prep (outside the per-call path).
    params = jax.block_until_ready(prepare_params(w1, b1, w2, b2))

    # Boundary contract: pad batch to a sublane multiple once, slice rows after.
    B = x.shape[0]
    B_pad = ((B + SUBLANE - 1) // SUBLANE) * SUBLANE
    x_pad = jnp.zeros((B_pad, IN_FEATURES), jnp.float32).at[:B].set(x)
    x_pad = jax.block_until_ready(x_pad)

    out_pad = jax.block_until_ready(mlp_forward(x_pad, params))
    out = out_pad[:B]

    # Reference check in plain JAX (same math as the PyTorch module).
    ref = jnp.maximum(x @ w1.T + b1, 0.0) @ w2.T + b2
    assert out.shape == (3, 1), out.shape
    assert jnp.allclose(out, ref, atol=1e-5, rtol=1e-5), (out, ref)

    print("KERNEL_OK")
</pallas_src>

<mosaic_0001>
module attributes {stable_mosaic.version = 11 : i64} {
  func.func @_mlp_kernel(%arg0: memref<8x10xf32, #tpu.memory_space<vmem>>, %arg1: memref<16x128xf32, #tpu.memory_space<vmem>>, %arg2: memref<8x1xf32, #tpu.memory_space<vmem>>) attributes {dimension_semantics = [], scalar_prefetch = 0 : i64, scratch_operands = 0 : i64, tpu.core_type = #tpu.core_type<tc>} {
    %c0 = arith.constant 0 : index
    %c0_0 = arith.constant 0 : index
    %0 = vector.load %arg0[%c0, %c0_0] : memref<8x10xf32, #tpu.memory_space<vmem>>, vector<8x10xf32>
    %c0_1 = arith.constant 0 : index
    %c0_2 = arith.constant 0 : index
    %1 = vector.load %arg1[%c0_1, %c0_2] : memref<16x128xf32, #tpu.memory_space<vmem>>, vector<10x128xf32>
    %cst = arith.constant dense<0.000000e+00> : vector<8x128xf32>
    %2 = tpu.matmul %0, %1, %cst {dimension_numbers = #tpu.dot_dimension_numbers<[1], [0], [0], [1], [0, 0, 1, 1], [], []>, precision = #tpu.contract_precision<fp32>} : vector<8x10xf32>, vector<10x128xf32>, vector<8x128xf32> -> vector<8x128xf32>
    %c10 = arith.constant 10 : index
    %c0_3 = arith.constant 0 : index
    %3 = vector.load %arg1[%c10, %c0_3] : memref<16x128xf32, #tpu.memory_space<vmem>>, vector<1x128xf32>
    %4 = vector.broadcast %3 : vector<1x128xf32> to vector<8x128xf32>
    %5 = arith.addf %2, %4 : vector<8x128xf32>
    %cst_4 = arith.constant 0.000000e+00 : f32
    %6 = vector.broadcast %cst_4 : f32 to vector<8x128xf32>
    %7 = arith.maximumf %5, %6 : vector<8x128xf32>
    %c11 = arith.constant 11 : index
    %c0_5 = arith.constant 0 : index
    %8 = vector.load %arg1[%c11, %c0_5] : memref<16x128xf32, #tpu.memory_space<vmem>>, vector<1x128xf32>
    %9 = vector.broadcast %8 : vector<1x128xf32> to vector<8x128xf32>
    %10 = arith.mulf %7, %9 : vector<8x128xf32>
    %cst_6 = arith.constant dense<0.000000e+00> : vector<8xf32>
    %11 = vector.multi_reduction <add>, %10, %cst_6 [1] : vector<8x128xf32> to vector<8xf32>
    %12 = vector.shape_cast %11 : vector<8xf32> to vector<8x1xf32>
    %c12 = arith.constant 12 : index
    %c0_7 = arith.constant 0 : index
    %13 = vector.load %arg1[%c12, %c0_7] : memref<16x128xf32, #tpu.memory_space<vmem>>, vector<1x1xf32>
    %14 = vector.broadcast %13 : vector<1x1xf32> to vector<8x1xf32>
    %15 = arith.addf %12, %14 : vector<8x1xf32>
    %c0_8 = arith.constant 0 : index
    %c0_9 = arith.constant 0 : index
    %16 = vector.load %arg2[%c0_8, %c0_9] : memref<8x1xf32, #tpu.memory_space<vmem>>, vector<8x1xf32>
    tpu.vector_store %arg2[%c0_8, %c0_9], %15 {strides = array<i32>} : memref<8x1xf32, #tpu.memory_space<vmem>>, vector<8x1xf32>,
    return
  }
}

</mosaic_0001>

<llo_original>
// kernel: mlp_forward.1
$region0: #{mlp_forward.1}
  #allocation0 [shape = 'u32[]', space=smem, size = 0x4, offset = 0x4, fixed_abs, tag = 'smem constant byte address 0x4 - core index']
  #allocation1 [shape = 'u32[144,128]{1,0:T(1,128)}', space=vmem, size = 0x12000, scoped, tag = 'internal scratch']
  %s0 = inlined_call_operand.hbm [shape: f32[8,10], index: 0, kind: input, shape index: {}]
  %s1 = inlined_call_operand.hbm [shape: f32[16,128], index: 1, kind: input, shape index: {}]
  %s2 = inlined_call_operand.vmem [shape: f32[8,1], index: 2, kind: output, shape index: {}]
  %s3 = sld [smem:[#allocation0]]
  $region26: #{mlp_forward.1} parent=0
    _
  %s5 = ssub.s32 1, %s3
  %s6 = scalar_select 0, %s5, %s3
  $region1: #{mlp_forward.1} parent=0
    #allocation2 [shape = 'u8[4096]{0}', space=vmem, size = 0x1000, scoped, tag = 'input window, operand 0, single buffered']
    #allocation3 [shape = 's32[1]{0}', space=sflag, size = 0x4, scoped, tag = 'scoped memory for mlp_forward.1']
    #allocation4 [shape = 'u8[8192]{0}', space=vmem, size = 0x2000, scoped, tag = 'input window, operand 1, single buffered']
    #allocation5 [shape = 's32[1]{0}', space=sflag, size = 0x4, scoped, tag = 'scoped memory for mlp_forward.1']
    %7 = vsyncpa [#allocation3], 0
    %8 = vsyncpa [#allocation5], 0
    // Predicated region
    $region2: #{mlp_forward.1} parent=1 // pred_check
      _
    $region3: #{mlp_forward.1} parent=1 // pred_check_branch
      %10 = sbr.rel (0) target = $region5
    $region4: #{mlp_forward.1} parent=1 // pred_region
      %s12 = ssub.s32 128, 128
      %13 = vsyncadd [#allocation3], %s12
      %s15 = sshll.u32 [#allocation2], 4
      %s16 = int_to_ptr.vmem [resolvable:$true] %s15
      %18 = dma.hbm_to_vmem [thread:$0]  %s0, 128, %s16, [#allocation3]
    $region5: #{mlp_forward.1} parent=1 // pred_fallthru
      _
    // Predicated region
    $region6: #{mlp_forward.1} parent=1 // pred_check
      _
    $region7: #{mlp_forward.1} parent=1 // pred_check_branch
      %20 = sbr.rel (0) target = $region9
    $region8: #{mlp_forward.1} parent=1 // pred_region
      %s22 = ssub.s32 256, 256
      %23 = vsyncadd [#allocation5], %s22
      %s24 = sshll.u32 [#allocation4], 4
      %s25 = int_to_ptr.vmem [resolvable:$true] %s24
      %30 = dma.hbm_to_vmem [thread:$0]  %s1, 256, %s25, [#allocation5], 128, 128, 8
    $region9: #{mlp_forward.1} parent=1 // pred_fallthru
      _
    // Predicated region
    $region10: #{mlp_forward.1} parent=1 // pred_check
      _
    $region11: #{mlp_forward.1} parent=1 // pred_check_branch
      %32 = sbr.rel (0) target = $region13
    $region12: #{mlp_forward.1} parent=1 // pred_region
      %33 = dma.done [#allocation3], 128
    $region13: #{mlp_forward.1} parent=1 // pred_fallthru
      _
    // Predicated region
    $region14: #{mlp_forward.1} parent=1 // pred_check
      _
    $region15: #{mlp_forward.1} parent=1 // pred_check_branch
      %35 = sbr.rel (0) target = $region17
    $region16: #{mlp_forward.1} parent=1 // pred_region
      %36 = dma.done [#allocation5], 256
    $region17: #{mlp_forward.1} parent=1 // pred_fallthru
      _
    %v37 = vld [vmem:[#allocation2] sm:$0xff]
    %v38 = vld [vmem:[#allocation4] sm:$0xff]
    %v39 = vld [vmem:[#allocation4 + $0x8] sm:$0x3]
    %v40 = vld [vmem:[#allocation4 + $0xa] sm:$0x1]
    %v41 = vlaneseq
    %v42 = vshrl.u32 %v41, 7
    %v43 = vsub.s32 0, %v42
    %v44 = vrot.slane %v40, %v43
    %vm45 = vcmask 80896
    %v47 = vsel %vm45, %v37, 0
    %vm49 = vcmask 1041408
    %v51 = vsel %vm49, %v39, 0
    %53 = vmatprep.subr.mxu0 0.0
    %v54 = vand.u32 %v38, 4294901760
    %55 = vmatpush1.msra.mxu0 %v54
    %56 = vmatprep.subr.mxu0 0.0
    %v57 = vand.u32 %v51, 4294901760
    %58 = vmatpush1.msra.mxu0 %v57
    %59 = vmatprep.subr.mxu0 0.0
    %60 = vmatpush1.msra.mxu0 0.0
    %61 = vmatprep.subr.mxu0 0.0
    %62 = vmatpush1.msra.mxu0 0.0
    %63 = vmatprep.subr.mxu0 0.0
    %64 = vmatpush1.msra.mxu0 0.0
    %65 = vmatprep.subr.mxu0 0.0
    %66 = vmatpush1.msra.mxu0 0.0
    %67 = vmatprep.subr.mxu0 0.0
    %68 = vmatpush1.msra.mxu0 0.0
    %69 = vmatprep.subr.mxu0 0.0
    %70 = vmatpush1.msra.mxu0 0.0
    %71 = vmatprep.subr.mxu0 0.0
    %72 = vmatpush1.msra.mxu0 0.0
    %73 = vmatprep.subr.mxu0 0.0
    %74 = vmatpush1.msra.mxu0 0.0
    %75 = vmatprep.subr.mxu0 0.0
    %76 = vmatpush1.msra.mxu0 0.0
    %77 = vmatprep.subr.mxu0 0.0
    %78 = vmatpush1.msra.mxu0 0.0
    %79 = vmatprep.subr.mxu0 0.0
    %80 = vmatpush1.msra.mxu0 0.0
    %81 = vmatprep.subr.mxu0 0.0
    %82 = vmatpush1.msra.mxu0 0.0
    %83 = vmatprep.subr.mxu0 0.0
    %84 = vmatpush1.msra.mxu0 0.0
    %85 = vmatprep.subr.mxu0 0.0
    %86 = vmatpush1.msra.mxu0 0.0
    %87 = vmatprep.subr.mxu0 0.0
    %88 = vmatpush1.msra.mxu0 0.0
    %89 = vmatprep.subr.mxu0 0.0
    %90 = vmatpush1.msra.mxu0 0.0
    %91 = vmatprep.subr.mxu0 0.0
    %92 = vmatpush1.msra.mxu0 0.0
    %93 = vmatprep.subr.mxu0 0.0
    %94 = vmatpush1.msra.mxu0 0.0
    %95 = vmatprep.subr.mxu0 0.0
    %96 = vmatpush1.msra.mxu0 0.0
    %97 = vmatprep.subr.mxu0 0.0
    %98 = vmatpush1.msra.mxu0 0.0
    %99 = vmatprep.subr.mxu0 0.0
    %100 = vmatpush1.msra.mxu0 0.0
    %101 = vmatprep.subr.mxu0 0.0
    %102 = vmatpush1.msra.mxu0 0.0
    %103 = vmatprep.subr.mxu0 0.0
    %104 = vmatpush1.msra.mxu0 0.0
    %105 = vmatprep.subr.mxu0 0.0
    %106 = vmatpush1.msra.mxu0 0.0
    %107 = vmatprep.subr.mxu0 0.0
    %108 = vmatpush1.msra.mxu0 0.0
    %109 = vmatprep.subr.mxu0 0.0
    %110 = vmatpush1.msra.mxu0 0.0
    %111 = vmatprep.subr.mxu0 0.0
    %112 = vmatpush1.msra.mxu0 0.0
    %113 = vmatprep.subr.mxu0 0.0
    %114 = vmatpush1.msra.mxu0 0.0
    %115 = vmatprep.subr.mxu0 0.0
    %116 = vmatpush1.msra.mxu0 0.0
    %117 = vmatprep.subr.mxu0 0.0
    %118 = vmatpush1.msra.mxu0 0.0
    %119 = vmatprep.mubr.f32.mxu0 0.0
    %v120 = vand.u32 %v47, 4294901760
    %v121 = vsub.f32 %v47, %v120
    %v122 = vand.u32 %v121, 4294901760
    %v123 = vsub.f32 %v121, %v122
    %v124 = vand.u32 %v123, 4294901760
    %125 = vmatmul.mubr.f32.gmra.mrb[0].mxu0 %v124
    %v126 = vpop.f32.mrb[0].mxu0
    %v127 = vadd.f32 %v44, %v126
    %v128 = vpop.f32.mrb[0].mxu0
    %129 = vdwg.mxu0
    %130 = vmatprep.subr.mxu0 0.0
    %v131 = vand.u32 %v38, 4294901760
    %v132 = vsub.f32 %v38, %v131
    %v133 = vand.u32 %v132, 4294901760
    %v134 = vsub.f32 %v132, %v133
    %v135 = vand.u32 %v134, 4294901760
    %136 = vmatpush1.msra.mxu0 %v135
    %137 = vmatprep.subr.mxu0 0.0
    %v138 = vand.u32 %v51, 4294901760
    %v139 = vsub.f32 %v51, %v138
    %v140 = vand.u32 %v139, 4294901760
    %v141 = vsub.f32 %v139, %v140
    %v142 = vand.u32 %v141, 4294901760
    %143 = vmatpush1.msra.mxu0 %v142
    %144 = vmatprep.subr.mxu0 0.0
    %145 = vmatpush1.msra.mxu0 0.0
    %146 = vmatprep.subr.mxu0 0.0
    %147 = vmatpush1.msra.mxu0 0.0
    %148 = vmatprep.subr.mxu0 0.0
    %149 = vmatpush1.msra.mxu0 0.0
    %150 = vmatprep.subr.mxu0 0.0
    %151 = vmatpush1.msra.mxu0 0.0
    %152 = vmatprep.subr.mxu0 0.0
    %153 = vmatpush1.msra.mxu0 0.0
    %154 = vmatprep.subr.mxu0 0.0
    %155 = vmatpush1.msra.mxu0 0.0
    %156 = vmatprep.subr.mxu0 0.0
    %157 = vmatpush1.msra.mxu0 0.0
    %158 = vmatprep.subr.mxu0 0.0
    %159 = vmatpush1.msra.mxu0 0.0
    %160 = vmatprep.subr.mxu0 0.0
    %161 = vmatpush1.msra.mxu0 0.0
    %162 = vmatprep.subr.mxu0 0.0
    %163 = vmatpush1.msra.mxu0 0.0
    %164 = vmatprep.subr.mxu0 0.0
    %165 = vmatpush1.msra.mxu0 0.0
    %166 = vmatprep.subr.mxu0 0.0
    %167 = vmatpush1.msra.mxu0 0.0
    %168 = vmatprep.subr.mxu0 0.0
    %169 = vmatpush1.msra.mxu0 0.0
    %170 = vmatprep.subr.mxu0 0.0
    %171 = vmatpush1.msra.mxu0 0.0
    %172 = vmatprep.subr.mxu0 0.0
    %173 = vmatpush1.msra.mxu0 0.0
    %174 = vmatprep.subr.mxu0 0.0
    %175 = vmatpush1.msra.mxu0 0.0
    %176 = vmatprep.subr.mxu0 0.0
    %177 = vmatpush1.msra.mxu0 0.0
    %178 = vmatprep.subr.mxu0 0.0
    %179 = vmatpush1.msra.mxu0 0.0
    %180 = vmatprep.subr.mxu0 0.0
    %181 = vmatpush1.msra.mxu0 0.0
    %182 = vmatprep.subr.mxu0 0.0
    %183 = vmatpush1.msra.mxu0 0.0
    %184 = vmatprep.subr.mxu0 0.0
    %185 = vmatpush1.msra.mxu0 0.0
    %186 = vmatprep.subr.mxu0 0.0
    %187 = vmatpush1.msra.mxu0 0.0
    %188 = vmatprep.subr.mxu0 0.0
    %189 = vmatpush1.msra.mxu0 0.0
    %190 = vmatprep.subr.mxu0 0.0
    %191 = vmatpush1.msra.mxu0 0.0
    %192 = vmatprep.subr.mxu0 0.0
    %193 = vmatpush1.msra.mxu0 0.0
    %194 = vmatprep.subr.mxu0 0.0
    %195 = vmatpush1.msra.mxu0 0.0
    %196 = vmatprep.subr.mxu0 0.0
    %197 = vmatpush1.msra.mxu0 0.0
    %198 = vmatprep.subr.mxu0 0.0
    %199 = vmatpush1.msra.mxu0 0.0
    %200 = vmatprep.subr.mxu0 0.0
    %201 = vmatpush1.msra.mxu0 0.0
    %202 = vmatprep.subr.mxu0 0.0
    %203 = vmatpush1.msra.mxu0 0.0
    %204 = vmatprep.mubr.f32.mxu0 0.0
    %v205 = vand.u32 %v47, 4294901760
    %206 = vmatmul.mubr.f32.gmra.mrb[0].mxu0 %v205
    %v207 = vpop.f32.mrb[0].mxu0
    %v208 = vadd.f32 %v127, %v207
    %v209 = vpop.f32.mrb[0].mxu0
    %210 = vdwg.mxu0
    %211 = vmatprep.subr.mxu0 0.0
    %v212 = vand.u32 %v38, 4294901760
    %v213 = vsub.f32 %v38, %v212
    %214 = vmatpush1.msra.mxu0 %v213
    %215 = vmatprep.subr.mxu0 0.0
    %v216 = vand.u32 %v51, 4294901760
    %v217 = vsub.f32 %v51, %v216
    %218 = vmatpush1.msra.mxu0 %v217
    %219 = vmatprep.subr.mxu0 0.0
    %220 = vmatpush1.msra.mxu0 0.0
    %221 = vmatprep.subr.mxu0 0.0
    %222 = vmatpush1.msra.mxu0 0.0
    %223 = vmatprep.subr.mxu0 0.0
    %224 = vmatpush1.msra.mxu0 0.0
    %225 = vmatprep.subr.mxu0 0.0
    %226 = vmatpush1.msra.mxu0 0.0
    %227 = vmatprep.subr.mxu0 0.0
    %228 = vmatpush1.msra.mxu0 0.0
    %229 = vmatprep.subr.mxu0 0.0
    %230 = vmatpush1.msra.mxu0 0.0
    %231 = vmatprep.subr.mxu0 0.0
    %232 = vmatpush1.msra.mxu0 0.0
    %233 = vmatprep.subr.mxu0 0.0
    %234 = vmatpush1.msra.mxu0 0.0
    %235 = vmatprep.subr.mxu0 0.0
    %236 = vmatpush1.msra.mxu0 0.0
    %237 = vmatprep.subr.mxu0 0.0
    %238 = vmatpush1.msra.mxu0 0.0
    %239 = vmatprep.subr.mxu0 0.0
    %240 = vmatpush1.msra.mxu0 0.0
    %241 = vmatprep.subr.mxu0 0.0
    %242 = vmatpush1.msra.mxu0 0.0
    %243 = vmatprep.subr.mxu0 0.0
    %244 = vmatpush1.msra.mxu0 0.0
    %245 = vmatprep.subr.mxu0 0.0
    %246 = vmatpush1.msra.mxu0 0.0
    %247 = vmatprep.subr.mxu0 0.0
    %248 = vmatpush1.msra.mxu0 0.0
    %249 = vmatprep.subr.mxu0 0.0
    %250 = vmatpush1.msra.mxu0 0.0
    %251 = vmatprep.subr.mxu0 0.0
    %252 = vmatpush1.msra.mxu0 0.0
    %253 = vmatprep.subr.mxu0 0.0
    %254 = vmatpush1.msra.mxu0 0.0
    %255 = vmatprep.subr.mxu0 0.0
    %256 = vmatpush1.msra.mxu0 0.0
    %257 = vmatprep.subr.mxu0 0.0
    %258 = vmatpush1.msra.mxu0 0.0
    %259 = vmatprep.subr.mxu0 0.0
    %260 = vmatpush1.msra.mxu0 0.0
    %261 = vmatprep.subr.mxu0 0.0
    %262 = vmatpush1.msra.mxu0 0.0
    %263 = vmatprep.subr.mxu0 0.0
    %264 = vmatpush1.msra.mxu0 0.0
    %265 = vmatprep.subr.mxu0 0.0
    %266 = vmatpush1.msra.mxu0 0.0
    %267 = vmatprep.subr.mxu0 0.0
    %268 = vmatpush1.msra.mxu0 0.0
    %269 = vmatprep.subr.mxu0 0.0
    %270 = vmatpush1.msra.mxu0 0.0
    %271 = vmatprep.subr.mxu0 0.0
    %272 = vmatpush1.msra.mxu0 0.0
    %273 = vmatprep.subr.mxu0 0.0
    %274 = vmatpush1.msra.mxu0 0.0
    %275 = vmatprep.subr.mxu0 0.0
    %276 = vmatpush1.msra.mxu0 0.0
    %277 = vmatprep.subr.mxu0 0.0
    %278 = vmatpush1.msra.mxu0 0.0
    %279 = vmatprep.mubr.f32.mxu0 0.0
    %v280 = vand.u32 %v47, 4294901760
    %v281 = vsub.f32 %v47, %v280
    %282 = vmatmul.mubr.f32.gmra.mrb[0].mxu0 %v281
    %v283 = vpop.f32.mrb[0].mxu0
    %v284 = vadd.f32 %v208, %v283
    %v285 = vpop.f32.mrb[0].mxu0
    %286 = vdwg.mxu0
    %287 = vmatprep.subr.mxu0 0.0
    %v288 = vand.u32 %v38, 4294901760
    %289 = vmatpush1.msra.mxu0 %v288
    %290 = vmatprep.subr.mxu0 0.0
    %v291 = vand.u32 %v51, 4294901760
    %292 = vmatpush1.msra.mxu0 %v291
    %293 = vmatprep.subr.mxu0 0.0
    %294 = vmatpush1.msra.mxu0 0.0
    %295 = vmatprep.subr.mxu0 0.0
    %296 = vmatpush1.msra.mxu0 0.0
    %297 = vmatprep.subr.mxu0 0.0
    %298 = vmatpush1.msra.mxu0 0.0
    %299 = vmatprep.subr.mxu0 0.0
    %300 = vmatpush1.msra.mxu0 0.0
    %301 = vmatprep.subr.mxu0 0.0
    %302 = vmatpush1.msra.mxu0 0.0
    %303 = vmatprep.subr.mxu0 0.0
    %304 = vmatpush1.msra.mxu0 0.0
    %305 = vmatprep.subr.mxu0 0.0
    %306 = vmatpush1.msra.mxu0 0.0
    %307 = vmatprep.subr.mxu0 0.0
    %308 = vmatpush1.msra.mxu0 0.0
    %309 = vmatprep.subr.mxu0 0.0
    %310 = vmatpush1.msra.mxu0 0.0
    %311 = vmatprep.subr.mxu0 0.0
    %312 = vmatpush1.msra.mxu0 0.0
    %313 = vmatprep.subr.mxu0 0.0
    %314 = vmatpush1.msra.mxu0 0.0
    %315 = vmatprep.subr.mxu0 0.0
    %316 = vmatpush1.msra.mxu0 0.0
    %317 = vmatprep.subr.mxu0 0.0
    %318 = vmatpush1.msra.mxu0 0.0
    %319 = vmatprep.subr.mxu0 0.0
    %320 = vmatpush1.msra.mxu0 0.0
    %321 = vmatprep.subr.mxu0 0.0
    %322 = vmatpush1.msra.mxu0 0.0
    %323 = vmatprep.subr.mxu0 0.0
    %324 = vmatpush1.msra.mxu0 0.0
    %325 = vmatprep.subr.mxu0 0.0
    %326 = vmatpush1.msra.mxu0 0.0
    %327 = vmatprep.subr.mxu0 0.0
    %328 = vmatpush1.msra.mxu0 0.0
    %329 = vmatprep.subr.mxu0 0.0
    %330 = vmatpush1.msra.mxu0 0.0
    %331 = vmatprep.subr.mxu0 0.0
    %332 = vmatpush1.msra.mxu0 0.0
    %333 = vmatprep.subr.mxu0 0.0
    %334 = vmatpush1.msra.mxu0 0.0
    %335 = vmatprep.subr.mxu0 0.0
    %336 = vmatpush1.msra.mxu0 0.0
    %337 = vmatprep.subr.mxu0 0.0
    %338 = vmatpush1.msra.mxu0 0.0
    %339 = vmatprep.subr.mxu0 0.0
    %340 = vmatpush1.msra.mxu0 0.0
    %341 = vmatprep.subr.mxu0 0.0
    %342 = vmatpush1.msra.mxu0 0.0
    %343 = vmatprep.subr.mxu0 0.0
    %344 = vmatpush1.msra.mxu0 0.0
    %345 = vmatprep.subr.mxu0 0.0
    %346 = vmatpush1.msra.mxu0 0.0
    %347 = vmatprep.subr.mxu0 0.0
    %348 = vmatpush1.msra.mxu0 0.0
    %349 = vmatprep.subr.mxu0 0.0
    %350 = vmatpush1.msra.mxu0 0.0
    %351 = vmatprep.subr.mxu0 0.0
    %352 = vmatpush1.msra.mxu0 0.0
    %353 = vmatprep.mubr.f32.mxu0 0.0
    %v354 = vand.u32 %v47, 4294901760
    %v355 = vsub.f32 %v47, %v354
    %v356 = vand.u32 %v355, 4294901760
    %357 = vmatmul.mubr.f32.gmra.mrb[0].mxu0 %v356
    %v358 = vpop.f32.mrb[0].mxu0
    %v359 = vadd.f32 %v284, %v358
    %v360 = vpop.f32.mrb[0].mxu0
    %361 = vdwg.mxu0
    %362 = vmatprep.subr.mxu0 0.0
    %v363 = vand.u32 %v38, 4294901760
    %v364 = vsub.f32 %v38, %v363
    %v365 = vand.u32 %v364, 4294901760
    %366 = vmatpush1.msra.mxu0 %v365
    %367 = vmatprep.subr.mxu0 0.0
    %v368 = vand.u32 %v51, 4294901760
    %v369 = vsub.f32 %v51, %v368
    %v370 = vand.u32 %v369, 4294901760
    %371 = vmatpush1.msra.mxu0 %v370
    %372 = vmatprep.subr.mxu0 0.0
    %373 = vmatpush1.msra.mxu0 0.0
    %374 = vmatprep.subr.mxu0 0.0
    %375 = vmatpush1.msra.mxu0 0.0
    %376 = vmatprep.subr.mxu0 0.0
    %377 = vmatpush1.msra.mxu0 0.0
    %378 = vmatprep.subr.mxu0 0.0
    %379 = vmatpush1.msra.mxu0 0.0
    %380 = vmatprep.subr.mxu0 0.0
    %381 = vmatpush1.msra.mxu0 0.0
    %382 = vmatprep.subr.mxu0 0.0
    %383 = vmatpush1.msra.mxu0 0.0
    %384 = vmatprep.subr.mxu0 0.0
    %385 = vmatpush1.msra.mxu0 0.0
    %386 = vmatprep.subr.mxu0 0.0
    %387 = vmatpush1.msra.mxu0 0.0
    %388 = vmatprep.subr.mxu0 0.0
    %389 = vmatpush1.msra.mxu0 0.0
    %390 = vmatprep.subr.mxu0 0.0
    %391 = vmatpush1.msra.mxu0 0.0
    %392 = vmatprep.subr.mxu0 0.0
    %393 = vmatpush1.msra.mxu0 0.0
    %394 = vmatprep.subr.mxu0 0.0
    %395 = vmatpush1.msra.mxu0 0.0
    %396 = vmatprep.subr.mxu0 0.0
    %397 = vmatpush1.msra.mxu0 0.0
    %398 = vmatprep.subr.mxu0 0.0
    %399 = vmatpush1.msra.mxu0 0.0
    %400 = vmatprep.subr.mxu0 0.0
    %401 = vmatpush1.msra.mxu0 0.0
    %402 = vmatprep.subr.mxu0 0.0
    %403 = vmatpush1.msra.mxu0 0.0
    %404 = vmatprep.subr.mxu0 0.0
    %405 = vmatpush1.msra.mxu0 0.0
    %406 = vmatprep.subr.mxu0 0.0
    %407 = vmatpush1.msra.mxu0 0.0
    %408 = vmatprep.subr.mxu0 0.0
    %409 = vmatpush1.msra.mxu0 0.0
    %410 = vmatprep.subr.mxu0 0.0
    %411 = vmatpush1.msra.mxu0 0.0
    %412 = vmatprep.subr.mxu0 0.0
    %413 = vmatpush1.msra.mxu0 0.0
    %414 = vmatprep.subr.mxu0 0.0
    %415 = vmatpush1.msra.mxu0 0.0
    %416 = vmatprep.subr.mxu0 0.0
    %417 = vmatpush1.msra.mxu0 0.0
    %418 = vmatprep.subr.mxu0 0.0
    %419 = vmatpush1.msra.mxu0 0.0
    %420 = vmatprep.subr.mxu0 0.0
    %421 = vmatpush1.msra.mxu0 0.0
    %422 = vmatprep.subr.mxu0 0.0
    %423 = vmatpush1.msra.mxu0 0.0
    %424 = vmatprep.subr.mxu0 0.0
    %425 = vmatpush1.msra.mxu0 0.0
    %426 = vmatprep.subr.mxu0 0.0
    %427 = vmatpush1.msra.mxu0 0.0
    %428 = vmatprep.subr.mxu0 0.0
    %429 = vmatpush1.msra.mxu0 0.0
    %430 = vmatprep.subr.mxu0 0.0
    %431 = vmatpush1.msra.mxu0 0.0
    %432 = vmatprep.mubr.f32.mxu0 0.0
    %v433 = vand.u32 %v47, 4294901760
    %434 = vmatmul.mubr.f32.gmra.mrb[0].mxu0 %v433
    %v435 = vpop.f32.mrb[0].mxu0
    %v436 = vadd.f32 %v359, %v435
    %v437 = vpop.f32.mrb[0].mxu0
    %438 = vdwg.mxu0
    %439 = vmatprep.subr.mxu0 0.0
    %v440 = vand.u32 %v38, 4294901760
    %441 = vmatpush1.msra.mxu0 %v440
    %442 = vmatprep.subr.mxu0 0.0
    %v443 = vand.u32 %v51, 4294901760
    %444 = vmatpush1.msra.mxu0 %v443
    %445 = vmatprep.subr.mxu0 0.0
    %446 = vmatpush1.msra.mxu0 0.0
    %447 = vmatprep.subr.mxu0 0.0
    %448 = vmatpush1.msra.mxu0 0.0
    %449 = vmatprep.subr.mxu0 0.0
    %450 = vmatpush1.msra.mxu0 0.0
    %451 = vmatprep.subr.mxu0 0.0
    %452 = vmatpush1.msra.mxu0 0.0
    %453 = vmatprep.subr.mxu0 0.0
    %454 = vmatpush1.msra.mxu0 0.0
    %455 = vmatprep.subr.mxu0 0.0
    %456 = vmatpush1.msra.mxu0 0.0
    %457 = vmatprep.subr.mxu0 0.0
    %458 = vmatpush1.msra.mxu0 0.0
    %459 = vmatprep.subr.mxu0 0.0
    %460 = vmatpush1.msra.mxu0 0.0
    %461 = vmatprep.subr.mxu0 0.0
    %462 = vmatpush1.msra.mxu0 0.0
    %463 = vmatprep.subr.mxu0 0.0
    %464 = vmatpush1.msra.mxu0 0.0
    %465 = vmatprep.subr.mxu0 0.0
    %466 = vmatpush1.msra.mxu0 0.0
    %467 = vmatprep.subr.mxu0 0.0
    %468 = vmatpush1.msra.mxu0 0.0
    %469 = vmatprep.subr.mxu0 0.0
    %470 = vmatpush1.msra.mxu0 0.0
    %471 = vmatprep.subr.mxu0 0.0
    %472 = vmatpush1.msra.mxu0 0.0
    %473 = vmatprep.subr.mxu0 0.0
    %474 = vmatpush1.msra.mxu0 0.0
    %475 = vmatprep.subr.mxu0 0.0
    %476 = vmatpush1.msra.mxu0 0.0
    %477 = vmatprep.subr.mxu0 0.0
    %478 = vmatpush1.msra.mxu0 0.0
    %479 = vmatprep.subr.mxu0 0.0
    %480 = vmatpush1.msra.mxu0 0.0
    %481 = vmatprep.subr.mxu0 0.0
    %482 = vmatpush1.msra.mxu0 0.0
    %483 = vmatprep.subr.mxu0 0.0
    %484 = vmatpush1.msra.mxu0 0.0
    %485 = vmatprep.subr.mxu0 0.0
    %486 = vmatpush1.msra.mxu0 0.0
    %487 = vmatprep.subr.mxu0 0.0
    %488 = vmatpush1.msra.mxu0 0.0
    %489 = vmatprep.subr.mxu0 0.0
    %490 = vmatpush1.msra.mxu0 0.0
    %491 = vmatprep.subr.mxu0 0.0
    %492 = vmatpush1.msra.mxu0 0.0
    %493 = vmatprep.subr.mxu0 0.0
    %494 = vmatpush1.msra.mxu0 0.0
    %495 = vmatprep.subr.mxu0 0.0
    %496 = vmatpush1.msra.mxu0 0.0
    %497 = vmatprep.subr.mxu0 0.0
    %498 = vmatpush1.msra.mxu0 0.0
    %499 = vmatprep.subr.mxu0 0.0
    %500 = vmatpush1.msra.mxu0 0.0
    %501 = vmatprep.subr.mxu0 0.0
    %502 = vmatpush1.msra.mxu0 0.0
    %503 = vmatprep.subr.mxu0 0.0
    %504 = vmatpush1.msra.mxu0 0.0
    %505 = vmatprep.mubr.f32.mxu0 0.0
    %v506 = vand.u32 %v47, 4294901760
    %507 = vmatmul.mubr.f32.gmra.mrb[0].mxu0 %v506
    %v508 = vpop.f32.mrb[0].mxu0
    %v509 = vadd.f32 %v436, %v508
    %v510 = vpop.f32.mrb[0].mxu0
    %511 = vdwg.mxu0
    %v512 = vmax.f32 %v509, 0.0
    %v513 = vld [vmem:[#allocation4 + $0xb] sm:$0x1]
    %v514 = vlaneseq
    %v515 = vshrl.u32 %v514, 7
    %v516 = vsub.s32 0, %v515
    %v517 = vrot.slane %v513, %v516
    %v518 = vmul.f32 %v512, %v517
    %519 = vadd.xlane.f32.xlu0 %v518
    %v520 = vpop.xlane.xlu0 %519
    %v521 = vld [vmem:[#allocation4 + $0xc] sm:$0x1]
    %v522 = vlaneseq
    %v523 = vshrl.u32 %v522, 7
    %v524 = vsub.s32 0, %v523
    %v525 = vrot.slane %v521, %v524
    %v526 = vadd.f32 %v520, %v525
    %vm527 = vcmask 7168
    %528 = vst.msk [vmem:[%s2] sm:$0xff] %vm527, %v526
    // Predicated region
    $region18: #{mlp_forward.1} parent=1 // pred_check
      _
    $region19: #{mlp_forward.1} parent=1 // pred_check_branch
      %530 = sbr.rel (0) target = $region21
    $region20: #{mlp_forward.1} parent=1 // pred_region
      _
    $region21: #{mlp_forward.1} parent=1 // pred_fallthru
      _
    // Predicated region
    $region22: #{mlp_forward.1} parent=1 // pred_check
      _
    $region23: #{mlp_forward.1} parent=1 // pred_check_branch
      %532 = sbr.rel (0) target = $region25
    $region24: #{mlp_forward.1} parent=1 // pred_region
      _
    $region25: #{mlp_forward.1} parent=1 // pred_fallthru
      _
    %533 = vsyncpa [#allocation3], 1
    %534 = vsyncpa [#allocation5], 1

</llo_original>
